<compile_context>
chip_gen: v5e
topology: v5e:2x2
jax: 0.10.0
libtpu: 0.0.40
codegen_flags: <defaults>
</compile_context>

<pallas_src>
import math
from functools import partial

import numpy as np
import jax
import jax.numpy as jnp
from jax.experimental import pallas as pl
from jax.experimental.pallas import tpu as pltpu

LANE_WIDTH = 512   # padded last-dim width (multiple of 128 -> lane-dense stores)
SUBLANES = 8


def _round_up(x, m):
    return ((x + m - 1) // m) * m


def _bi2uni_kernel(in_ref, acc_in_ref, oacc_in_ref,
                   out_ref, acc_ref, oacc_ref):
    """Grid = (row_tiles [parallel], T [arbitrary]).

    The acc/oacc *output* blocks are constant over the T axis, so they stay
    VMEM-resident for the whole stream chunk and are written back to HBM once
    per row tile; input_output_aliases makes that an in-place state update.
    """
    @pl.when(pl.program_id(1) == 0)
    def _():
        acc_ref[...] = acc_in_ref[...]
        oacc_ref[...] = oacc_in_ref[...]

    x = in_ref[0].astype(jnp.float32)          # native (narrow) dtype -> f32 in-kernel
    acc = acc_ref[...] + (x * 2.0 - 1.0)
    out = acc > oacc_ref[...]

    out_ref[0] = out.astype(out_ref.dtype)     # written directly in stype
    acc_ref[...] = acc
    oacc_ref[...] = oacc_ref[...] + out.astype(jnp.float32)


def _bi2uni_call(x_3d, acc_2d, oacc_2d, *, tile_rows, out_dtype):
    """Bi2Uni over T stream bits on padded (T, rows, LANE_WIDTH) input."""
    T, rows, lanes = x_3d.shape
    assert rows % tile_rows == 0 and tile_rows % SUBLANES == 0 and lanes % 128 == 0

    bit_spec = pl.BlockSpec((1, tile_rows, lanes), lambda i, t: (t, i, 0))
    state_spec = pl.BlockSpec((tile_rows, lanes), lambda i, t: (i, 0))

    return pl.pallas_call(
        _bi2uni_kernel,
        out_shape=(
            jax.ShapeDtypeStruct((T, rows, lanes), out_dtype),
            jax.ShapeDtypeStruct((rows, lanes), jnp.float32),
            jax.ShapeDtypeStruct((rows, lanes), jnp.float32),
        ),
        grid_spec=pltpu.PrefetchScalarGridSpec(
            num_scalar_prefetch=0,
            grid=(rows // tile_rows, T),
            in_specs=[bit_spec, state_spec, state_spec],
            out_specs=[bit_spec, state_spec, state_spec],
        ),
        # acc / out_acc are updated in place in their existing HBM buffers.
        input_output_aliases={1: 1, 2: 2},
        compiler_params=pltpu.CompilerParams(
            dimension_semantics=("parallel", "arbitrary"),
            vmem_limit_bytes=32 << 20,   # fits v7x (64 MiB VMEM/TC); fine on v5e/v6e
        ),
    )(x_3d, acc_2d, oacc_2d)


@partial(jax.jit,
         static_argnames=("orig_shape", "total", "rows", "tile_rows", "out_dtype"),
         donate_argnums=(1, 2))
def _bi2uni_step(xs, acc_2d, oacc_2d, *,
                 orig_shape, total, rows, tile_rows, out_dtype):
    """One fused step: pad/reshape -> pallas_call -> unpad, with donated state."""
    T = xs.shape[0]
    padded = rows * LANE_WIDTH
    x_flat = xs.reshape(T, total)
    if padded != total:
        x_flat = jnp.pad(x_flat, ((0, 0), (0, padded - total)))
    x_3d = x_flat.reshape(T, rows, LANE_WIDTH)

    out_3d, acc_new, oacc_new = _bi2uni_call(
        x_3d, acc_2d, oacc_2d, tile_rows=tile_rows, out_dtype=out_dtype)

    out = out_3d.reshape(T, padded)[:, :total].reshape((T,) + orig_shape)
    return out, acc_new, oacc_new


class Bi2Uni:
    """JAX/Pallas port of the stateful PyTorch Bi2Uni module."""

    def __init__(self, stype=jnp.float32, tile_rows=1024):
        self.stype = np.dtype(stype)
        self.tile_rows = int(tile_rows)
        self._acc = None     # persistent state, padded lane-dense (rows, LANE_WIDTH) f32
        self._oacc = None
        self._layout = None  # (orig_shape, total, rows, tile_rows)

    def _plan_layout(self, shape):
        shape = tuple(int(s) for s in shape)
        total = math.prod(shape)
        rows = _round_up(pl.cdiv(total, LANE_WIDTH), SUBLANES)
        tr = _round_up(min(self.tile_rows, rows), SUBLANES)
        # Ensure >= 2 row blocks whenever possible so the "parallel" axis can be
        # sharded across both v7x TensorCores (and the pipeline has > 1 step).
        if rows // tr < 2 and rows >= 2 * SUBLANES:
            tr = _round_up(pl.cdiv(rows, 2), SUBLANES)
        rows = _round_up(rows, tr)
        return (shape, total, rows, tr)

    def _ensure_state(self, elem_shape):
        layout = self._plan_layout(elem_shape)
        if self._layout != layout or self._acc is None:
            # (re)initialize state, mirroring the lazy broadcast of the torch Parameter
            self._layout = layout
            rows = layout[2]
            self._acc = jnp.zeros((rows, LANE_WIDTH), jnp.float32)
            self._oacc = jnp.zeros((rows, LANE_WIDTH), jnp.float32)
        return self._layout

    def forward_steps(self, xs):
        """Process T stream bits in one fused launch; xs has shape (T, *elem_shape)."""
        orig_shape, total, rows, tr = self._ensure_state(xs.shape[1:])
        out, self._acc, self._oacc = _bi2uni_step(
            xs, self._acc, self._oacc,
            orig_shape=orig_shape, total=total, rows=rows, tile_rows=tr,
            out_dtype=self.stype)
        return out

    def __call__(self, x):
        return self.forward_steps(x[None])[0]

    def state(self):
        """Current (accumulator, out_accumulator) in the original input shape."""
        orig_shape, total, _, _ = self._layout
        acc = self._acc.reshape(-1)[:total].reshape(orig_shape)
        oacc = self._oacc.reshape(-1)[:total].reshape(orig_shape)
        return acc, oacc


def _reference(x, acc, oacc):
    """Pure-JAX transcription of the PyTorch forward (for verification)."""
    acc = acc + (x.astype(jnp.float32) * 2.0 - 1.0)
    out = (acc > oacc).astype(jnp.float32)
    oacc = oacc + out
    return out, acc, oacc


if __name__ == "__main__":
    key = jax.random.PRNGKey(0)
    B, C, H, W = 2, 4, 16, 16          # NCHW bipolar bit-streams of {0, 1}
    T = 3

    # bipolar value > 0  ->  bit probability > 0.5; keep the stream in a narrow
    # native dtype (bf16) — the kernel upcasts internally.
    keys = jax.random.split(key, T)
    streams = [
        jax.random.bernoulli(k, p=0.7, shape=(B, C, H, W)).astype(jnp.bfloat16)
        for k in keys
    ]

    # pure-JAX reference, stepped bit by bit
    acc_ref = jnp.zeros((B, C, H, W), jnp.float32)
    oacc_ref = jnp.zeros((B, C, H, W), jnp.float32)
    refs = []
    for x in streams:
        r, acc_ref, oacc_ref = _reference(x, acc_ref, oacc_ref)
        refs.append(r)

    # 1) single-bit-per-call path (matches the PyTorch module API)
    mod = Bi2Uni()
    outs = [mod(x) for x in streams]
    jax.block_until_ready(outs)
    for step, (o, r) in enumerate(zip(outs, refs)):
        assert o.dtype == mod.stype, f"dtype mismatch at step {step}"
        assert jnp.array_equal(o.astype(jnp.float32), r), f"output mismatch at step {step}"
    acc_state, oacc_state = mod.state()
    assert jnp.array_equal(acc_state, acc_ref), "accumulator state mismatch"
    assert jnp.array_equal(oacc_state, oacc_ref), "out_accumulator state mismatch"

    # 2) fused multi-bit path (T bits per launch, VMEM-resident accumulators)
    mod2 = Bi2Uni()
    outs_fused = mod2.forward_steps(jnp.stack(streams))
    jax.block_until_ready(outs_fused)
    for step in range(T):
        assert jnp.array_equal(outs_fused[step].astype(jnp.float32), refs[step]), \
            f"fused output mismatch at step {step}"
    acc_state2, oacc_state2 = mod2.state()
    assert jnp.array_equal(acc_state2, acc_ref), "fused accumulator state mismatch"
    assert jnp.array_equal(oacc_state2, oacc_ref), "fused out_accumulator state mismatch"

    print("KERNEL_OK")
</pallas_src>

<mosaic_0001>
module attributes {stable_mosaic.version = 11 : i64} {
  func.func @_bi2uni_kernel(%arg0: i32, %arg1: i32, %arg2: memref<1x8x512xbf16, #tpu.memory_space<vmem>>, %arg3: memref<8x512xf32, #tpu.memory_space<vmem>>, %arg4: memref<8x512xf32, #tpu.memory_space<vmem>>, %arg5: memref<1x8x512xf32, #tpu.memory_space<vmem>>, %arg6: memref<8x512xf32, #tpu.memory_space<vmem>>, %arg7: memref<8x512xf32, #tpu.memory_space<vmem>>) attributes {dimension_semantics = [#tpu.dimension_semantics<parallel>, #tpu.dimension_semantics<arbitrary>], iteration_bounds = array<i64: 1, 1>, scalar_prefetch = 0 : i64, scratch_operands = 0 : i64, tpu.core_type = #tpu.core_type<tc>, window_params = [{transform_indices = @transform_0, window_bounds = array<i64: 1, 8, 512>}, {transform_indices = @transform_1, window_bounds = array<i64: 8, 512>}, {transform_indices = @transform_2, window_bounds = array<i64: 8, 512>}, {transform_indices = @transform_3, window_bounds = array<i64: 1, 8, 512>}, {transform_indices = @transform_4, window_bounds = array<i64: 8, 512>}, {transform_indices = @transform_5, window_bounds = array<i64: 8, 512>}]} {
    %c0_i32 = arith.constant 0 : i32
    %0 = arith.cmpi eq, %arg1, %c0_i32 : i32
    %1 = arith.extui %0 : i1 to i32
    %c0_i32_0 = arith.constant 0 : i32
    %2 = arith.cmpi ne, %1, %c0_i32_0 : i32
    scf.if %2 {
      %c0_17 = arith.constant 0 : index
      %c0_18 = arith.constant 0 : index
      %25 = vector.load %arg3[%c0_17, %c0_18] : memref<8x512xf32, #tpu.memory_space<vmem>>, vector<8x512xf32>
      %c0_19 = arith.constant 0 : index
      %c0_20 = arith.constant 0 : index
      %26 = vector.load %arg6[%c0_19, %c0_20] : memref<8x512xf32, #tpu.memory_space<vmem>>, vector<8x512xf32>
      tpu.vector_store %arg6[%c0_19, %c0_20], %25 {strides = array<i32>} : memref<8x512xf32, #tpu.memory_space<vmem>>, vector<8x512xf32>,
      %c0_21 = arith.constant 0 : index
      %c0_22 = arith.constant 0 : index
      %27 = vector.load %arg4[%c0_21, %c0_22] : memref<8x512xf32, #tpu.memory_space<vmem>>, vector<8x512xf32>
      %c0_23 = arith.constant 0 : index
      %c0_24 = arith.constant 0 : index
      %28 = vector.load %arg7[%c0_23, %c0_24] : memref<8x512xf32, #tpu.memory_space<vmem>>, vector<8x512xf32>
      tpu.vector_store %arg7[%c0_23, %c0_24], %27 {strides = array<i32>} : memref<8x512xf32, #tpu.memory_space<vmem>>, vector<8x512xf32>,
    } else {
    }
    %c0 = arith.constant 0 : index
    %c0_1 = arith.constant 0 : index
    %c0_2 = arith.constant 0 : index
    %3 = vector.load %arg2[%c0, %c0_1, %c0_2] : memref<1x8x512xbf16, #tpu.memory_space<vmem>>, vector<1x8x512xbf16>
    %4 = vector.shape_cast %3 : vector<1x8x512xbf16> to vector<8x512xbf16>
    %5 = arith.extf %4 : vector<8x512xbf16> to vector<8x512xf32>
    %c0_3 = arith.constant 0 : index
    %c0_4 = arith.constant 0 : index
    %6 = vector.load %arg6[%c0_3, %c0_4] : memref<8x512xf32, #tpu.memory_space<vmem>>, vector<8x512xf32>
    %cst = arith.constant 2.000000e+00 : f32
    %7 = vector.broadcast %cst : f32 to vector<8x512xf32>
    %8 = arith.mulf %5, %7 : vector<8x512xf32>
    %cst_5 = arith.constant 1.000000e+00 : f32
    %9 = vector.broadcast %cst_5 : f32 to vector<8x512xf32>
    %10 = arith.subf %8, %9 : vector<8x512xf32>
    %11 = arith.addf %6, %10 : vector<8x512xf32>
    %c0_6 = arith.constant 0 : index
    %c0_7 = arith.constant 0 : index
    %12 = vector.load %arg7[%c0_6, %c0_7] : memref<8x512xf32, #tpu.memory_space<vmem>>, vector<8x512xf32>
    %13 = arith.cmpf ogt, %11, %12 : vector<8x512xf32>
    %14 = arith.extui %13 : vector<8x512xi1> to vector<8x512xi32>
    %15 = arith.sitofp %14 : vector<8x512xi32> to vector<8x512xf32>
    %c0_8 = arith.constant 0 : index
    %c0_9 = arith.constant 0 : index
    %c0_10 = arith.constant 0 : index
    %16 = vector.load %arg5[%c0_8, %c0_9, %c0_10] : memref<1x8x512xf32, #tpu.memory_space<vmem>>, vector<1x8x512xf32>
    %17 = vector.shape_cast %16 : vector<1x8x512xf32> to vector<8x512xf32>
    %18 = vector.shape_cast %15 : vector<8x512xf32> to vector<1x8x512xf32>
    tpu.vector_store %arg5[%c0_8, %c0_9, %c0_10], %18 {strides = array<i32>} : memref<1x8x512xf32, #tpu.memory_space<vmem>>, vector<1x8x512xf32>,
    %c0_11 = arith.constant 0 : index
    %c0_12 = arith.constant 0 : index
    %19 = vector.load %arg6[%c0_11, %c0_12] : memref<8x512xf32, #tpu.memory_space<vmem>>, vector<8x512xf32>
    tpu.vector_store %arg6[%c0_11, %c0_12], %11 {strides = array<i32>} : memref<8x512xf32, #tpu.memory_space<vmem>>, vector<8x512xf32>,
    %c0_13 = arith.constant 0 : index
    %c0_14 = arith.constant 0 : index
    %20 = vector.load %arg7[%c0_13, %c0_14] : memref<8x512xf32, #tpu.memory_space<vmem>>, vector<8x512xf32>
    %21 = arith.extui %13 : vector<8x512xi1> to vector<8x512xi32>
    %22 = arith.sitofp %21 : vector<8x512xi32> to vector<8x512xf32>
    %23 = arith.addf %20, %22 : vector<8x512xf32>
    %c0_15 = arith.constant 0 : index
    %c0_16 = arith.constant 0 : index
    %24 = vector.load %arg7[%c0_15, %c0_16] : memref<8x512xf32, #tpu.memory_space<vmem>>, vector<8x512xf32>
    tpu.vector_store %arg7[%c0_15, %c0_16], %23 {strides = array<i32>} : memref<8x512xf32, #tpu.memory_space<vmem>>, vector<8x512xf32>,
    return
  }
  func.func @transform_0(%arg0: i32, %arg1: i32) -> (i32, i32, i32) {
    %c0_i32 = arith.constant 0 : i32
    %c0_i32_0 = arith.constant 0 : i32
    return %arg1, %arg0, %c0_i32 : i32, i32, i32
  }
  func.func @transform_1(%arg0: i32, %arg1: i32) -> (i32, i32) {
    %c0_i32 = arith.constant 0 : i32
    %c0_i32_0 = arith.constant 0 : i32
    return %arg0, %c0_i32 : i32, i32
  }
  func.func @transform_2(%arg0: i32, %arg1: i32) -> (i32, i32) {
    %c0_i32 = arith.constant 0 : i32
    %c0_i32_0 = arith.constant 0 : i32
    return %arg0, %c0_i32 : i32, i32
  }
  func.func @transform_3(%arg0: i32, %arg1: i32) -> (i32, i32, i32) {
    %c0_i32 = arith.constant 0 : i32
    %c0_i32_0 = arith.constant 0 : i32
    return %arg1, %arg0, %c0_i32 : i32, i32, i32
  }
  func.func @transform_4(%arg0: i32, %arg1: i32) -> (i32, i32) {
    %c0_i32 = arith.constant 0 : i32
    %c0_i32_0 = arith.constant 0 : i32
    return %arg0, %c0_i32 : i32, i32
  }
  func.func @transform_5(%arg0: i32, %arg1: i32) -> (i32, i32) {
    %c0_i32 = arith.constant 0 : i32
    %c0_i32_0 = arith.constant 0 : i32
    return %arg0, %c0_i32 : i32, i32
  }
}

</mosaic_0001>

<llo_original>
// kernel: _bi2uni_step.1
$region0: #{_bi2uni_step.1}
  #allocation0 [shape = 'u32[]', space=smem, size = 0x4, offset = 0x4, fixed_abs, tag = 'smem constant byte address 0x4 - core index']
  #allocation1 [shape = 'u32[72,128]{1,0:T(1,128)}', space=vmem, size = 0x9000, scoped, tag = 'internal scratch']
  %s0 = inlined_call_operand.vmem [shape: bf16[1,8,512], index: 0, kind: input, shape index: {}]
  %s1 = inlined_call_operand.vmem [shape: f32[8,512], index: 1, kind: input, shape index: {}, may-alias: {1,4}]
  %s2 = inlined_call_operand.vmem [shape: f32[8,512], index: 2, kind: input, shape index: {}, may-alias: {2,5}]
  %s3 = inlined_call_operand.vmem [shape: f32[1,8,512], index: 3, kind: output, shape index: {0}]
  %s4 = inlined_call_operand.vmem [shape: f32[8,512], index: 4, kind: output, shape index: {1}, may-alias: {1,4}]
  %s5 = inlined_call_operand.vmem [shape: f32[8,512], index: 5, kind: output, shape index: {2}, may-alias: {2,5}]
  %6 = xla_tuple %s3, %s4, %s5
  %s7 = sld [smem:[#allocation0]]
  $region42: #{_bi2uni_step.1} parent=0
    _
  %s9 = ssub.s32 1, %s7
  %s10 = scalar_select 0, %s9, %s7
  // Predicated region
  $region2: #{_bi2uni_step.1} parent=0 // pred_check
    _
  $region3: #{_bi2uni_step.1} parent=0 // pred_check_branch
    %12 = sbr.rel (0) target = $region5
  $region4: #{_bi2uni_step.1} parent=0 // pred_region
    _
  $region5: #{_bi2uni_step.1} parent=0 // pred_fallthru
    _
  // Predicated region
  $region6: #{_bi2uni_step.1} parent=0 // pred_check
    _
  $region7: #{_bi2uni_step.1} parent=0 // pred_check_branch
    %14 = sbr.rel (0) target = $region9
  $region8: #{_bi2uni_step.1} parent=0 // pred_region
    _
  $region9: #{_bi2uni_step.1} parent=0 // pred_fallthru
    _
  // Predicated region
  $region10: #{_bi2uni_step.1} parent=0 // pred_check
    _
  $region11: #{_bi2uni_step.1} parent=0 // pred_check_branch
    %16 = sbr.rel (0) target = $region13
  $region12: #{_bi2uni_step.1} parent=0 // pred_region
    _
  $region13: #{_bi2uni_step.1} parent=0 // pred_fallthru
    _
  %p17 = scmp.eq.s32.totalorder 0, 0
  // Predicated region
  $region14: #{_bi2uni_step.1} parent=0 // pred_check
    %p18 = pneg %p17
  $region15: #{_bi2uni_step.1} parent=0 // pred_check_branch
    %20 = sbr.rel (%p18) target = $region17
  $region16: #{_bi2uni_step.1} parent=0 // pred_region
    %v21 = vld [vmem:[%s1] sm:$0xff]
    %v22 = vld [vmem:[%s1 + $0x8] sm:$0xff]
    %v23 = vld [vmem:[%s1 + $0x10] sm:$0xff]
    %v24 = vld [vmem:[%s1 + $0x18] sm:$0xff]
    %25 = vst [vmem:[%s4] sm:$0xff] %v21
    %26 = vst [vmem:[%s4 + $0x8] sm:$0xff] %v22
    %27 = vst [vmem:[%s4 + $0x10] sm:$0xff] %v23
    %28 = vst [vmem:[%s4 + $0x18] sm:$0xff] %v24
    %v29 = vld [vmem:[%s2] sm:$0xff]
    %v30 = vld [vmem:[%s2 + $0x8] sm:$0xff]
    %v31 = vld [vmem:[%s2 + $0x10] sm:$0xff]
    %v32 = vld [vmem:[%s2 + $0x18] sm:$0xff]
    %33 = vst [vmem:[%s5] sm:$0xff] %v29
    %34 = vst [vmem:[%s5 + $0x8] sm:$0xff] %v30
    %35 = vst [vmem:[%s5 + $0x10] sm:$0xff] %v31
    %36 = vst [vmem:[%s5 + $0x18] sm:$0xff] %v32
  $region17: #{_bi2uni_step.1} parent=0 // pred_fallthru
    _
  %v37 = vld [vmem:[%s0] sm:$0xff]
  %v38 = vld [vmem:[%s0 + $0x8] sm:$0xff]
  %v39 = vunpack.c.l.bf16 %v37
  %v40 = vunpack.c.h.bf16 %v37
  %v41 = vunpack.c.l.bf16 %v38
  %v42 = vunpack.c.h.bf16 %v38
  %v43 = vld [vmem:[%s4] sm:$0xff]
  %v44 = vld [vmem:[%s4 + $0x8] sm:$0xff]
  %v45 = vld [vmem:[%s4 + $0x10] sm:$0xff]
  %v46 = vld [vmem:[%s4 + $0x18] sm:$0xff]
  %v47 = vmul.f32 %v39, 2.0
  %v48 = vmul.f32 %v40, 2.0
  %v49 = vmul.f32 %v41, 2.0
  %v50 = vmul.f32 %v42, 2.0
  %v51 = vsub.f32 %v47, 1.0
  %v52 = vsub.f32 %v48, 1.0
  %v53 = vsub.f32 %v49, 1.0
  %v54 = vsub.f32 %v50, 1.0
  %v55 = vadd.f32 %v43, %v51
  %v56 = vadd.f32 %v44, %v52
  %v57 = vadd.f32 %v45, %v53
  %v58 = vadd.f32 %v46, %v54
  %v59 = vld [vmem:[%s5] sm:$0xff]
  %v60 = vld [vmem:[%s5 + $0x8] sm:$0xff]
  %v61 = vld [vmem:[%s5 + $0x10] sm:$0xff]
  %v62 = vld [vmem:[%s5 + $0x18] sm:$0xff]
  %vm63 = vcmp.gt.f32.partialorder %v55, %v59
  %vm64 = vcmp.gt.f32.partialorder %v56, %v60
  %vm65 = vcmp.gt.f32.partialorder %v57, %v61
  %vm66 = vcmp.gt.f32.partialorder %v58, %v62
  %v67 = vsel %vm63, 1, 0
  %v68 = vsel %vm64, 1, 0
  %v69 = vsel %vm65, 1, 0
  %v70 = vsel %vm66, 1, 0
  %v71 = vcvt.s32.f32 %v67
  %v72 = vcvt.s32.f32 %v68
  %v73 = vcvt.s32.f32 %v69
  %v74 = vcvt.s32.f32 %v70
  %75 = vst [vmem:[%s3] sm:$0xff] %v71
  %76 = vst [vmem:[%s3 + $0x8] sm:$0xff] %v72
  %77 = vst [vmem:[%s3 + $0x10] sm:$0xff] %v73
  %78 = vst [vmem:[%s3 + $0x18] sm:$0xff] %v74
  %79 = vst [vmem:[%s4] sm:$0xff] %v55
  %80 = vst [vmem:[%s4 + $0x8] sm:$0xff] %v56
  %81 = vst [vmem:[%s4 + $0x10] sm:$0xff] %v57
  %82 = vst [vmem:[%s4 + $0x18] sm:$0xff] %v58
  %v83 = vld [vmem:[%s5] sm:$0xff]
  %v84 = vld [vmem:[%s5 + $0x8] sm:$0xff]
  %v85 = vld [vmem:[%s5 + $0x10] sm:$0xff]
  %v86 = vld [vmem:[%s5 + $0x18] sm:$0xff]
  %v87 = vadd.f32 %v83, %v71
  %v88 = vadd.f32 %v84, %v72
  %v89 = vadd.f32 %v85, %v73
  %v90 = vadd.f32 %v86, %v74
  %91 = vst [vmem:[%s5] sm:$0xff] %v87
  %92 = vst [vmem:[%s5 + $0x8] sm:$0xff] %v88
  %93 = vst [vmem:[%s5 + $0x10] sm:$0xff] %v89
  %94 = vst [vmem:[%s5 + $0x18] sm:$0xff] %v90
  // Predicated region
  $region18: #{_bi2uni_step.1} parent=0 // pred_check
    _
  $region19: #{_bi2uni_step.1} parent=0 // pred_check_branch
    %96 = sbr.rel (0) target = $region21
  $region20: #{_bi2uni_step.1} parent=0 // pred_region
    _
  $region21: #{_bi2uni_step.1} parent=0 // pred_fallthru
    _
  // Predicated region
  $region22: #{_bi2uni_step.1} parent=0 // pred_check
    _
  $region23: #{_bi2uni_step.1} parent=0 // pred_check_branch
    %98 = sbr.rel (0) target = $region25
  $region24: #{_bi2uni_step.1} parent=0 // pred_region
    _
  $region25: #{_bi2uni_step.1} parent=0 // pred_fallthru
    _
  // Predicated region
  $region26: #{_bi2uni_step.1} parent=0 // pred_check
    _
  $region27: #{_bi2uni_step.1} parent=0 // pred_check_branch
    %100 = sbr.rel (0) target = $region29
  $region28: #{_bi2uni_step.1} parent=0 // pred_region
    _
  $region29: #{_bi2uni_step.1} parent=0 // pred_fallthru
    _
  // Predicated region
  $region30: #{_bi2uni_step.1} parent=0 // pred_check
    _
  $region31: #{_bi2uni_step.1} parent=0 // pred_check_branch
    %102 = sbr.rel (0) target = $region33
  $region32: #{_bi2uni_step.1} parent=0 // pred_region
    _
  $region33: #{_bi2uni_step.1} parent=0 // pred_fallthru
    _
  // Predicated region
  $region34: #{_bi2uni_step.1} parent=0 // pred_check
    _
  $region35: #{_bi2uni_step.1} parent=0 // pred_check_branch
    %104 = sbr.rel (0) target = $region37
  $region36: #{_bi2uni_step.1} parent=0 // pred_region
    _
  $region37: #{_bi2uni_step.1} parent=0 // pred_fallthru
    _
  // Predicated region
  $region38: #{_bi2uni_step.1} parent=0 // pred_check
    _
  $region39: #{_bi2uni_step.1} parent=0 // pred_check_branch
    %106 = sbr.rel (0) target = $region41
  $region40: #{_bi2uni_step.1} parent=0 // pred_region
    _
  $region41: #{_bi2uni_step.1} parent=0 // pred_fallthru
    _

</llo_original>
